<compile_context>
chip_gen: v5e
topology: v5e:2x2
jax: 0.10.0
libtpu: 0.0.40
codegen_flags: <defaults>
</compile_context>

<pallas_src>
import functools

import jax
import jax.numpy as jnp
from jax.experimental import pallas as pl
from jax.experimental.pallas import tpu as pltpu


def _round_up(x, m):
    return ((x + m - 1) // m) * m


def _rbfnet_kernel(x_ref, a_ref, k_ref, w_ref, b_ref, o_ref):
    # x_ref: (Dp, tn)     augmented, transposed inputs (rows: x_0..x_{D-1}, ||x||^2, 0-pad)
    # a_ref: (C_pad, Dp)  folded centre matrix  [2*c/sigma^2 | -1/sigma^2 | 0-pad]
    # k_ref: (C_pad, 1)   folded constant       -||c||^2/sigma^2
    # w_ref: (O, C_pad)   linear weight (zero columns for padded centres)
    # b_ref: (O, 1)       linear bias
    # o_ref: (O, tn)      transposed output tile (lane-dense store, no O padding)
    z = jnp.dot(a_ref[...], x_ref[...], preferred_element_type=jnp.float32)   # (C_pad, tn)
    phi = jnp.exp(z + k_ref[...])                                             # gaussian basis
    o_ref[...] = (jnp.dot(w_ref[...], phi, preferred_element_type=jnp.float32)
                  + b_ref[...])


@functools.partial(jax.jit, static_argnames=("tile_n",))
def rbfnet_forward(x, centres, log_sigmas, w, b, *, tile_n=2048):
    """RBFNet forward.

    x: (N, D); centres: (C, D); log_sigmas: (C,); w: (O, C) [nn.Linear weight]; b: (O,).
    Returns (N, O) float32.
    """
    N, D = x.shape
    C = centres.shape[0]
    O = w.shape[0]

    x = x.astype(jnp.float32)
    centres = centres.astype(jnp.float32)
    log_sigmas = log_sigmas.astype(jnp.float32)
    w = w.astype(jnp.float32)
    b = b.astype(jnp.float32)

    # ---- tiling over N (the lane axis) ----
    n_lanes = _round_up(N, 128)
    tn = min(_round_up(max(int(tile_n), 128), 128), n_lanes)   # multiple of 128, defensively
    # Ensure >=2 grid steps when there's enough work so both v7x TensorCores get a share
    # of the "parallel" N axis (essentially free on single-core v5e / v6e).
    if tn == n_lanes and n_lanes >= 2 * 128:
        tn = _round_up(n_lanes // 2, 128)
    N_pad = _round_up(N, tn)
    grid = (N_pad // tn,)

    # ---- one-time parameter folding (outside the grid) ----
    C_pad = _round_up(C, 8)      # sublane alignment only; no 128-padding of the exp work
    Dp = _round_up(D + 1, 8)     # augmented feature dim (x, ||x||^2), sublane aligned

    inv_sigma2 = jnp.exp(-2.0 * log_sigmas)                                   # (C,)
    a = jnp.zeros((C_pad, Dp), jnp.float32)
    a = a.at[:C, :D].set(2.0 * inv_sigma2[:, None] * centres)
    a = a.at[:C, D].set(-inv_sigma2)
    k = jnp.zeros((C_pad, 1), jnp.float32)
    k = k.at[:C, 0].set(-inv_sigma2 * jnp.sum(centres * centres, axis=-1))
    # Padded centres: a-row = 0 and k = 0 -> phi = exp(0) = 1, but their w columns are 0.
    w_p = jnp.zeros((O, C_pad), jnp.float32).at[:, :C].set(w)
    b_col = b.reshape(O, 1)

    # Augmented, transposed input: lane-dense x loads; padded columns are zero and the
    # corresponding output columns are sliced off below.
    x_aug = jnp.zeros((Dp, N_pad), jnp.float32)
    x_aug = x_aug.at[:D, :N].set(x.T)
    x_aug = x_aug.at[D, :N].set(jnp.sum(x * x, axis=-1))

    cost = pl.CostEstimate(
        flops=2 * C_pad * N_pad * (Dp + O) + 2 * C_pad * N_pad + O * N_pad,
        transcendentals=C_pad * N_pad,
        bytes_accessed=4 * (x_aug.size + a.size + k.size + w_p.size
                            + b_col.size + O * N_pad),
    )

    out_t = pl.pallas_call(
        _rbfnet_kernel,
        out_shape=jax.ShapeDtypeStruct((O, N_pad), jnp.float32),
        grid=grid,
        in_specs=[
            pl.BlockSpec((Dp, tn), lambda i: (0, i)),       # x_aug: tiled over N (lanes)
            # Grid-invariant operands stay VMEM-resident (constant index_map).
            # NOTE: for very large C/O, pipeline_mode=pl.Buffered(1) would halve their
            # VMEM footprint; negligible at this size, so omitted for portability.
            pl.BlockSpec((C_pad, Dp), lambda i: (0, 0)),    # folded centres
            pl.BlockSpec((C_pad, 1), lambda i: (0, 0)),     # -||c||^2 / sigma^2
            pl.BlockSpec((O, C_pad), lambda i: (0, 0)),     # linear weight
            pl.BlockSpec((O, 1), lambda i: (0, 0)),         # linear bias
        ],
        out_specs=pl.BlockSpec((O, tn), lambda i: (0, i)),  # (O, tn): lane-dense store
        compiler_params=pltpu.CompilerParams(
            dimension_semantics=("parallel",),              # megacore-shardable on v7x
            vmem_limit_bytes=32 * 1024 * 1024,              # explicit (v5e default is 16 MiB)
        ),
        cost_estimate=cost,
    )(x_aug, a, k, w_p, b_col)

    # Tiny (O, N) slice + transpose back to the PyTorch (N, O) layout.
    return out_t[:, :N].T


def rbfnet_reference(x, centres, log_sigmas, w, b):
    # Pure-JAX reference mirroring the PyTorch forward exactly.
    diff = x[:, None, :] - centres[None, :, :]                        # (N, C, D)
    dist = jnp.sqrt(jnp.sum(diff * diff, axis=-1)) / jnp.exp(log_sigmas)[None, :]
    phi = jnp.exp(-(dist * dist))                                     # gaussian
    return phi @ w.T + b[None, :]


if __name__ == "__main__":
    # RBFNet(layer_widths=[4, 2], layer_centres=32, basis_func=gaussian)
    N, D, C, O = 8, 4, 32, 2

    key = jax.random.PRNGKey(0)
    k_x, k_c, k_w, k_b = jax.random.split(key, 4)

    x = jax.random.normal(k_x, (N, D), dtype=jnp.float32)

    # Deterministic parameter init (shapes as in RBF.__init__ / nn.Linear):
    centres = jax.random.normal(k_c, (C, D), dtype=jnp.float32)       # centres ~ N(0,1)
    log_sigmas = jnp.zeros((C,), dtype=jnp.float32)                   # log_sigmas = 0
    bound = float(1.0 / (C ** 0.5))
    w = jax.random.uniform(k_w, (O, C), minval=-bound, maxval=bound, dtype=jnp.float32)
    b = jax.random.uniform(k_b, (O,), minval=-bound, maxval=bound, dtype=jnp.float32)

    out = rbfnet_forward(x, centres, log_sigmas, w, b)
    out = jax.block_until_ready(out)

    ref = rbfnet_reference(x, centres, log_sigmas, w, b)
    assert out.shape == (N, O)
    assert jnp.allclose(out, ref, atol=1e-4, rtol=1e-4), (out, ref)

    # TODO(synk): RBFNet.fit (Adam training loop / backward) is host-side training code,
    # not part of the forward pass, so it is intentionally not implemented as a kernel.
    print("KERNEL_OK")
</pallas_src>

<mosaic_0001>
module attributes {stable_mosaic.version = 11 : i64} {
  func.func @_rbfnet_kernel(%arg0: i32, %arg1: memref<8x128xf32, #tpu.memory_space<vmem>>, %arg2: memref<32x8xf32, #tpu.memory_space<vmem>>, %arg3: memref<32x1xf32, #tpu.memory_space<vmem>>, %arg4: memref<2x32xf32, #tpu.memory_space<vmem>>, %arg5: memref<2x1xf32, #tpu.memory_space<vmem>>, %arg6: memref<2x128xf32, #tpu.memory_space<vmem>>) attributes {dimension_semantics = [#tpu.dimension_semantics<parallel>], iteration_bounds = array<i64: 1>, scalar_prefetch = 0 : i64, scratch_operands = 0 : i64, tpu.core_type = #tpu.core_type<tc>, window_params = [{transform_indices = @transform_0, window_bounds = array<i64: 8, 128>}, {pipeline_mode = #tpu.pipeline_mode<synchronous>, transform_indices = @transform_1, window_bounds = array<i64: 32, 8>}, {pipeline_mode = #tpu.pipeline_mode<synchronous>, transform_indices = @transform_2, window_bounds = array<i64: 32, 1>}, {pipeline_mode = #tpu.pipeline_mode<synchronous>, transform_indices = @transform_3, window_bounds = array<i64: 2, 32>}, {pipeline_mode = #tpu.pipeline_mode<synchronous>, transform_indices = @transform_4, window_bounds = array<i64: 2, 1>}, {transform_indices = @transform_5, window_bounds = array<i64: 2, 128>}]} {
    %c0 = arith.constant 0 : index
    %c0_0 = arith.constant 0 : index
    %0 = vector.load %arg2[%c0, %c0_0] : memref<32x8xf32, #tpu.memory_space<vmem>>, vector<32x8xf32>
    %c0_1 = arith.constant 0 : index
    %c0_2 = arith.constant 0 : index
    %1 = vector.load %arg1[%c0_1, %c0_2] : memref<8x128xf32, #tpu.memory_space<vmem>>, vector<8x128xf32>
    %cst = arith.constant dense<0.000000e+00> : vector<32x128xf32>
    %2 = tpu.matmul %0, %1, %cst {dimension_numbers = #tpu.dot_dimension_numbers<[1], [0], [0], [1], [0, 0, 1, 1], [], []>} : vector<32x8xf32>, vector<8x128xf32>, vector<32x128xf32> -> vector<32x128xf32>
    %c0_3 = arith.constant 0 : index
    %c0_4 = arith.constant 0 : index
    %3 = vector.load %arg3[%c0_3, %c0_4] : memref<32x1xf32, #tpu.memory_space<vmem>>, vector<32x1xf32>
    %4 = vector.broadcast %3 : vector<32x1xf32> to vector<32x128xf32>
    %5 = arith.addf %2, %4 : vector<32x128xf32>
    %6 = math.exp %5 : vector<32x128xf32>
    %c0_5 = arith.constant 0 : index
    %c0_6 = arith.constant 0 : index
    %7 = vector.load %arg4[%c0_5, %c0_6] : memref<2x32xf32, #tpu.memory_space<vmem>>, vector<2x32xf32>
    %cst_7 = arith.constant dense<0.000000e+00> : vector<2x128xf32>
    %8 = tpu.matmul %7, %6, %cst_7 {dimension_numbers = #tpu.dot_dimension_numbers<[1], [0], [0], [1], [0, 0, 1, 1], [], []>} : vector<2x32xf32>, vector<32x128xf32>, vector<2x128xf32> -> vector<2x128xf32>
    %c0_8 = arith.constant 0 : index
    %c0_9 = arith.constant 0 : index
    %9 = vector.load %arg5[%c0_8, %c0_9] : memref<2x1xf32, #tpu.memory_space<vmem>>, vector<2x1xf32>
    %10 = vector.broadcast %9 : vector<2x1xf32> to vector<2x128xf32>
    %11 = arith.addf %8, %10 : vector<2x128xf32>
    %c0_10 = arith.constant 0 : index
    %c0_11 = arith.constant 0 : index
    %12 = vector.load %arg6[%c0_10, %c0_11] : memref<2x128xf32, #tpu.memory_space<vmem>>, vector<2x128xf32>
    tpu.vector_store %arg6[%c0_10, %c0_11], %11 {strides = array<i32>} : memref<2x128xf32, #tpu.memory_space<vmem>>, vector<2x128xf32>,
    return
  }
  func.func @transform_0(%arg0: i32) -> (i32, i32) {
    %c0_i32 = arith.constant 0 : i32
    %c0_i32_0 = arith.constant 0 : i32
    return %c0_i32, %arg0 : i32, i32
  }
  func.func @transform_1(%arg0: i32) -> (i32, i32) {
    %c0_i32 = arith.constant 0 : i32
    %c0_i32_0 = arith.constant 0 : i32
    %c0_i32_1 = arith.constant 0 : i32
    return %c0_i32, %c0_i32_0 : i32, i32
  }
  func.func @transform_2(%arg0: i32) -> (i32, i32) {
    %c0_i32 = arith.constant 0 : i32
    %c0_i32_0 = arith.constant 0 : i32
    %c0_i32_1 = arith.constant 0 : i32
    return %c0_i32, %c0_i32_0 : i32, i32
  }
  func.func @transform_3(%arg0: i32) -> (i32, i32) {
    %c0_i32 = arith.constant 0 : i32
    %c0_i32_0 = arith.constant 0 : i32
    %c0_i32_1 = arith.constant 0 : i32
    return %c0_i32, %c0_i32_0 : i32, i32
  }
  func.func @transform_4(%arg0: i32) -> (i32, i32) {
    %c0_i32 = arith.constant 0 : i32
    %c0_i32_0 = arith.constant 0 : i32
    %c0_i32_1 = arith.constant 0 : i32
    return %c0_i32, %c0_i32_0 : i32, i32
  }
  func.func @transform_5(%arg0: i32) -> (i32, i32) {
    %c0_i32 = arith.constant 0 : i32
    %c0_i32_0 = arith.constant 0 : i32
    return %c0_i32, %arg0 : i32, i32
  }
}

</mosaic_0001>

<llo_original>
// kernel: rbfnet_forward.1
$region0: #{rbfnet_forward.1}
  #allocation0 [shape = 'u32[]', space=smem, size = 0x4, offset = 0x4, fixed_abs, tag = 'smem constant byte address 0x4 - core index']
  #allocation1 [shape = 'u32[72,128]{1,0:T(1,128)}', space=vmem, size = 0x9000, scoped, tag = 'internal scratch']
  %s0 = inlined_call_operand.vmem [shape: f32[8,128], index: 0, kind: input, shape index: {}]
  %s1 = inlined_call_operand.vmem [shape: f32[32,8], index: 1, kind: input, shape index: {}]
  %s2 = inlined_call_operand.vmem [shape: f32[32,1], index: 2, kind: input, shape index: {}]
  %s3 = inlined_call_operand.vmem [shape: f32[2,32], index: 3, kind: input, shape index: {}]
  %s4 = inlined_call_operand.vmem [shape: f32[2,1], index: 4, kind: input, shape index: {}]
  %s5 = inlined_call_operand.vmem [shape: f32[2,128], index: 5, kind: output, shape index: {}]
  %s6 = sld [smem:[#allocation0]]
  $region30: #{rbfnet_forward.1} parent=0
    _
  %s8 = ssub.s32 1, %s6
  %s9 = scalar_select 0, %s8, %s6
  // Predicated region
  $region2: #{rbfnet_forward.1} parent=0 // pred_check
    _
  $region3: #{rbfnet_forward.1} parent=0 // pred_check_branch
    %11 = sbr.rel (0) target = $region5
  $region4: #{rbfnet_forward.1} parent=0 // pred_region
    _
  $region5: #{rbfnet_forward.1} parent=0 // pred_fallthru
    _
  // Predicated region
  $region6: #{rbfnet_forward.1} parent=0 // pred_check
    _
  $region7: #{rbfnet_forward.1} parent=0 // pred_check_branch
    %13 = sbr.rel (0) target = $region9
  $region8: #{rbfnet_forward.1} parent=0 // pred_region
    _
  $region9: #{rbfnet_forward.1} parent=0 // pred_fallthru
    _
  // Predicated region
  $region10: #{rbfnet_forward.1} parent=0 // pred_check
    _
  $region11: #{rbfnet_forward.1} parent=0 // pred_check_branch
    %15 = sbr.rel (0) target = $region13
  $region12: #{rbfnet_forward.1} parent=0 // pred_region
    _
  $region13: #{rbfnet_forward.1} parent=0 // pred_fallthru
    _
  // Predicated region
  $region14: #{rbfnet_forward.1} parent=0 // pred_check
    _
  $region15: #{rbfnet_forward.1} parent=0 // pred_check_branch
    %17 = sbr.rel (0) target = $region17
  $region16: #{rbfnet_forward.1} parent=0 // pred_region
    _
  $region17: #{rbfnet_forward.1} parent=0 // pred_fallthru
    _
  // Predicated region
  $region18: #{rbfnet_forward.1} parent=0 // pred_check
    _
  $region19: #{rbfnet_forward.1} parent=0 // pred_check_branch
    %19 = sbr.rel (0) target = $region21
  $region20: #{rbfnet_forward.1} parent=0 // pred_region
    _
  $region21: #{rbfnet_forward.1} parent=0 // pred_fallthru
    _
  %v20 = vld [vmem:[%s1] sm:$0xff]
  %v21 = vld [vmem:[%s1 + $0x8] sm:$0xff]
  %v22 = vld [vmem:[%s1 + $0x10] sm:$0xff]
  %v23 = vld [vmem:[%s1 + $0x18] sm:$0xff]
  %v24 = vld [vmem:[%s0] sm:$0xff]
  %v25 = vld [vmem:[%s2] sm:$0xff]
  %v26 = vld [vmem:[%s2 + $0x8] sm:$0xff]
  %v27 = vld [vmem:[%s2 + $0x10] sm:$0xff]
  %v28 = vld [vmem:[%s2 + $0x18] sm:$0xff]
  %30 = vset.pattern.permute.xlu0 0
  %31 = vperm.xlu0 %30, %v25
  %v32 = vpop.permute.xlu0 %31
  %35 = vset.pattern.permute.xlu0 0
  %36 = vperm.xlu0 %35, %v26
  %v37 = vpop.permute.xlu0 %36
  %40 = vset.pattern.permute.xlu0 0
  %41 = vperm.xlu0 %40, %v27
  %v42 = vpop.permute.xlu0 %41
  %45 = vset.pattern.permute.xlu0 0
  %46 = vperm.xlu0 %45, %v28
  %v47 = vpop.permute.xlu0 %46
  %vm49 = vcmask 64512
  %v51 = vsel %vm49, %v20, 0
  %v54 = vsel %vm49, %v21, 0
  %v57 = vsel %vm49, %v22, 0
  %v60 = vsel %vm49, %v23, 0
  %62 = vmatpush.msra.mxu0 0.0
  %63 = vmatpush.msra.mxu0 0.0
  %64 = vmatpush.msra.mxu0 0.0
  %65 = vmatpush.msra.mxu0 0.0
  %66 = vmatpush.msra.mxu0 0.0
  %67 = vmatpush.msra.mxu0 0.0
  %68 = vmatpush.msra.mxu0 0.0
  %69 = vmatpush.msra.mxu0 0.0
  %70 = vmatpush.msra.mxu0 0.0
  %71 = vmatpush.msra.mxu0 0.0
  %72 = vmatpush.msra.mxu0 0.0
  %73 = vmatpush.msra.mxu0 0.0
  %74 = vmatpush.msra.mxu0 0.0
  %75 = vmatpush.msra.mxu0 0.0
  %76 = vmatpush.msra.mxu0 0.0
  %77 = vmatpush.msra.mxu0 %v24
  %78 = vmatmul.f32.gmra.mxu0 %v51
  %v79 = vpop.f32.mrf.mxu0
  %v80 = vadd.f32 %v32, %v79
  %81 = vmatmul.f32.gmra.mxu0 %v54
  %v82 = vpop.f32.mrf.mxu0
  %v83 = vadd.f32 %v37, %v82
  %84 = vmatmul.f32.gmra.mxu0 %v57
  %v85 = vpop.f32.mrf.mxu0
  %v86 = vadd.f32 %v42, %v85
  %87 = vmatmul.f32.gmra.mxu0 %v60
  %v88 = vpop.f32.mrf.mxu0
  %v89 = vadd.f32 %v47, %v88
  %90 = vdwg.mxu0
  %v91 = vmul.f32 %v80, 1.442695
  %v92 = vpow.pop %v91
  %v93 = vmul.f32 %v83, 1.442695
  %v94 = vpow.pop %v93
  %v95 = vmul.f32 %v86, 1.442695
  %v96 = vpow.pop %v95
  %v97 = vmul.f32 %v89, 1.442695
  %v98 = vpow.pop %v97
  %v99 = vld [vmem:[%s3] sm:$0x3]
  %v100 = vld [vmem:[%s4] sm:$0x3]
  %102 = vset.pattern.permute.xlu0 0
  %103 = vperm.xlu0 %102, %v100
  %v104 = vpop.permute.xlu0 %103
  %vm106 = vcmask 261120
  %v108 = vsel %vm106, %v99, 0
  %110 = vmatpush.msra.mxu0 0.0
  %111 = vmatpush.msra.mxu0 0.0
  %112 = vmatpush.msra.mxu0 0.0
  %113 = vmatpush.msra.mxu0 0.0
  %114 = vmatpush.msra.mxu0 0.0
  %115 = vmatpush.msra.mxu0 0.0
  %116 = vmatpush.msra.mxu0 0.0
  %117 = vmatpush.msra.mxu0 0.0
  %118 = vmatpush.msra.mxu0 0.0
  %119 = vmatpush.msra.mxu0 0.0
  %120 = vmatpush.msra.mxu0 0.0
  %121 = vmatpush.msra.mxu0 0.0
  %122 = vmatpush.msra.mxu0 %v98
  %123 = vmatpush.msra.mxu0 %v96
  %124 = vmatpush.msra.mxu0 %v94
  %125 = vmatpush.msra.mxu0 %v92
  %126 = vmatmul.f32.gmra.mxu0 %v108
  %v127 = vpop.f32.mrf.mxu0
  %v128 = vadd.f32 %v104, %v127
  %129 = vdwg.mxu0
  %130 = vst [vmem:[%s5] sm:$0x3] %v128
  // Predicated region
  $region22: #{rbfnet_forward.1} parent=0 // pred_check
    _
  $region23: #{rbfnet_forward.1} parent=0 // pred_check_branch
    %132 = sbr.rel (0) target = $region25
  $region24: #{rbfnet_forward.1} parent=0 // pred_region
    _
  $region25: #{rbfnet_forward.1} parent=0 // pred_fallthru
    _
  // Predicated region
  $region26: #{rbfnet_forward.1} parent=0 // pred_check
    _
  $region27: #{rbfnet_forward.1} parent=0 // pred_check_branch
    %134 = sbr.rel (0) target = $region29
  $region28: #{rbfnet_forward.1} parent=0 // pred_region
    _
  $region29: #{rbfnet_forward.1} parent=0 // pred_fallthru
    _

</llo_original>
